<compile_context>
chip_gen: v7x
topology: tpu7x:2x2x1
jax: 0.10.0
libtpu: 0.0.40
codegen_flags: <defaults>
</compile_context>

<pallas_src>
import functools

import jax
import jax.numpy as jnp
from jax.experimental import pallas as pl
from jax.experimental.pallas import tpu as pltpu

EPS = 1e-6
LANES = 128


def _rup8(x):
    return (x + 7) // 8 * 8


def _make_kernel(input_dim, embed, num_class, offs):
    fw_off, fb_off, mw_off, mb_off, ow_off, ob_off = offs

    def kernel(adj_ref, wgt_ref, feat_ref, w_ref, out_ref):
        adj = adj_ref[...]
        wgt = wgt_ref[...]
        feats = feat_ref[...]

        # static slices of the packed parameter slab (zero-cost ref views)
        fw = w_ref[fw_off:fw_off + input_dim, :embed]          # (in, emb)
        fb = w_ref[fb_off:fb_off + 1, :embed]                  # (1, emb)
        mw = w_ref[mw_off:mw_off + embed, :embed]              # (emb, emb)
        mb = w_ref[mb_off:mb_off + 1, :embed]                  # (1, emb)
        ow = w_ref[ow_off:ow_off + embed, :num_class]          # (emb, cls)  = pw @ ow
        ob = w_ref[ob_off:ob_off + 1, :num_class]              # (1, cls)    = pb @ ow + ob

        # ---- feature_linear + activation (ReLU) ----------------------------
        h = jnp.dot(feats, fw, preferred_element_type=jnp.float32) + fb
        h = jnp.maximum(h, 0.0)

        # ---- rgnn: tangent message + weighted dense aggregation ------------
        msg = jnp.dot(h, mw, preferred_element_type=jnp.float32) + mb
        agg = jnp.dot(adj * wgt, msg, preferred_element_type=jnp.float32)
        # mask is all ones -> no-op.

        # ---- Poincare exp_map_zero: tanh(||v||) * v / max(||v||, eps) -------
        sumsq = jnp.sum(agg * agg, axis=-1, keepdims=True)
        v_norm = jnp.sqrt(sumsq)                                   # EUP
        inv_v = jax.lax.rsqrt(jnp.maximum(sumsq, EPS * EPS))       # 1/clamp_min(||v||, eps)
        hyp = jnp.tanh(jnp.clip(v_norm, 0.0, 15.0)) * agg * inv_v

        # ---- log_map_zero: artanh(clip(||x||)) * x / max(||x||, eps) --------
        x_sumsq = jnp.sum(hyp * hyp, axis=-1, keepdims=True)
        x_norm = jnp.clip(jnp.sqrt(x_sumsq), EPS, 1.0 - EPS)
        inv_x = jax.lax.rsqrt(jnp.maximum(x_sumsq, EPS * EPS))
        artanh = 0.5 * (jnp.log1p(x_norm) - jnp.log1p(-x_norm))
        tangent = artanh * hyp * inv_x

        # ---- fused (project_pool ∘ output_linear) ---------------------------
        logits = jnp.dot(tangent, ow, preferred_element_type=jnp.float32) + ob

        # ---- log_softmax over dim=1 (class dim, last axis) ------------------
        m = jnp.max(logits, axis=-1, keepdims=True)
        z = logits - m
        lse = jnp.log(jnp.sum(jnp.exp(z), axis=-1, keepdims=True))
        out_ref[...] = z - lse

    return kernel


def pack_params(params):
    """Fold project_pool+output_linear and pack everything into one (R,128) slab."""
    input_dim, embed = params["fw"].shape
    num_class = params["ow"].shape[1]
    assert embed <= LANES and num_class <= LANES and input_dim <= LANES

    fw_off = 0
    fb_off = fw_off + _rup8(input_dim)
    mw_off = fb_off + 8
    mb_off = mw_off + _rup8(embed)
    ow_off = mb_off + 8
    ob_off = ow_off + _rup8(embed)
    rows = ob_off + 8
    offs = (fw_off, fb_off, mw_off, mb_off, ow_off, ob_off)

    # exact fold: no nonlinearity between project_pool and output_linear
    ow_folded = params["pw"].astype(jnp.float32) @ params["ow"].astype(jnp.float32)
    ob_folded = params["pb"].astype(jnp.float32) @ params["ow"].astype(jnp.float32) \
        + params["ob"].astype(jnp.float32)

    slab = jnp.zeros((rows, LANES), jnp.float32)
    slab = slab.at[fw_off:fw_off + input_dim, :embed].set(params["fw"].astype(jnp.float32))
    slab = slab.at[fb_off, :embed].set(params["fb"].astype(jnp.float32))
    slab = slab.at[mw_off:mw_off + embed, :embed].set(params["mw"].astype(jnp.float32))
    slab = slab.at[mb_off, :embed].set(params["mb"].astype(jnp.float32))
    slab = slab.at[ow_off:ow_off + embed, :num_class].set(ow_folded)
    slab = slab.at[ob_off, :num_class].set(ob_folded)

    dims = (input_dim, embed, num_class)
    return slab, offs, dims


@functools.partial(jax.jit, static_argnames=("offs", "dims"))
def node_classification_extended(adj, weight, features, param_slab, offs, dims):
    """adj, weight: (1, N, N); features: (1, N, input_dim). Returns (N, num_class)."""
    assert adj.shape[0] == 1
    adj = jnp.squeeze(adj, axis=0).astype(jnp.float32)
    weight = jnp.squeeze(weight, axis=0).astype(jnp.float32)
    features = jnp.squeeze(features, axis=0).astype(jnp.float32)

    input_dim, embed, num_class = dims
    n = features.shape[0]

    vmem_spec = pl.BlockSpec(memory_space=pltpu.MemorySpace.VMEM)
    kernel = _make_kernel(input_dim, embed, num_class, offs)

    # grid=() / whole-array VMEM blocks: the whole footprint is < 64 KiB, so
    # any tiling or extra grid axes at this size would be pure overhead.
    return pl.pallas_call(
        kernel,
        out_shape=jax.ShapeDtypeStruct((n, num_class), jnp.float32),
        in_specs=[vmem_spec] * 4,
        out_specs=vmem_spec,
    )(adj, weight, features, param_slab)


def _reference(adj, weight, features, params):
    """Pure-JAX reference (unfused) for correctness checking."""
    adj = jnp.squeeze(adj, 0)
    weight = jnp.squeeze(weight, 0)
    feats = jnp.squeeze(features, 0)
    h = jnp.maximum(feats @ params["fw"] + params["fb"], 0.0)
    msg = h @ params["mw"] + params["mb"]
    agg = (adj * weight) @ msg
    nrm = jnp.linalg.norm(agg, axis=-1, keepdims=True)
    hyp = jnp.tanh(jnp.clip(nrm, 0.0, 15.0)) * agg / jnp.maximum(nrm, EPS)
    xn = jnp.linalg.norm(hyp, axis=-1, keepdims=True)
    xnc = jnp.clip(xn, EPS, 1.0 - EPS)
    tangent = jnp.arctanh(xnc) * hyp / jnp.maximum(xn, EPS)
    pooled = tangent @ params["pw"] + params["pb"]
    logits = pooled @ params["ow"] + params["ob"]
    return jax.nn.log_softmax(logits, axis=1)


def _init_params(key, input_dim, embed_size, num_class):
    """Deterministic xavier-uniform-ish init (stands in for nn_init(..., proj_init))."""
    def xavier(k, shape):
        fan_in, fan_out = shape
        limit = jnp.sqrt(6.0 / (fan_in + fan_out))
        return jax.random.uniform(k, shape, jnp.float32, -limit, limit)

    ks = jax.random.split(key, 4)
    return {
        "fw": xavier(ks[0], (input_dim, embed_size)),
        "fb": jnp.zeros((embed_size,), jnp.float32),
        "mw": xavier(ks[1], (embed_size, embed_size)),
        "mb": jnp.zeros((embed_size,), jnp.float32),
        "pw": xavier(ks[2], (embed_size, embed_size)),
        "pb": jnp.zeros((embed_size,), jnp.float32),
        "ow": xavier(ks[3], (embed_size, num_class)),
        "ob": jnp.zeros((num_class,), jnp.float32),
    }


if __name__ == "__main__":
    node_num, input_dim, embed_size, num_class = 16, 8, 32, 8

    key = jax.random.PRNGKey(0)
    k_adj, k_w, k_x, k_p = jax.random.split(key, 4)

    # deterministic synthetic graph: random sparse-ish adjacency + edge weights
    adj = (jax.random.uniform(k_adj, (1, node_num, node_num)) < 0.3).astype(jnp.float32)
    adj = jnp.maximum(adj, jnp.eye(node_num)[None])           # keep self-loops
    edge_weight = jax.random.uniform(k_w, (1, node_num, node_num), jnp.float32, 0.1, 1.0)
    features = jax.random.normal(k_x, (1, node_num, input_dim), jnp.float32)

    params = _init_params(k_p, input_dim, embed_size, num_class)
    param_slab, offs, dims = pack_params(params)

    out = node_classification_extended(adj, edge_weight, features, param_slab, offs, dims)
    out = jax.block_until_ready(out)

    assert out.shape == (node_num, num_class)
    # rows of log-softmax must exp-sum to 1
    assert jnp.allclose(jnp.sum(jnp.exp(out), axis=1), 1.0, atol=1e-4)
    # match the unfused pure-JAX reference
    ref = _reference(adj, edge_weight, features, params)
    assert jnp.allclose(out, ref, atol=1e-4, rtol=1e-4)
    print("KERNEL_OK")
</pallas_src>

<mosaic_0001>
module attributes {stable_mosaic.version = 11 : i64} {
  func.func @kernel(%arg0: memref<16x16xf32, #tpu.memory_space<vmem>>, %arg1: memref<16x16xf32, #tpu.memory_space<vmem>>, %arg2: memref<16x8xf32, #tpu.memory_space<vmem>>, %arg3: memref<96x128xf32, #tpu.memory_space<vmem>>, %arg4: memref<16x8xf32, #tpu.memory_space<vmem>>) attributes {dimension_semantics = [], scalar_prefetch = 0 : i64, scratch_operands = 0 : i64, tpu.core_type = #tpu.core_type<tc>} {
    %c0 = arith.constant 0 : index
    %c0_0 = arith.constant 0 : index
    %0 = vector.load %arg0[%c0, %c0_0] : memref<16x16xf32, #tpu.memory_space<vmem>>, vector<16x16xf32>
    %c0_1 = arith.constant 0 : index
    %c0_2 = arith.constant 0 : index
    %1 = vector.load %arg1[%c0_1, %c0_2] : memref<16x16xf32, #tpu.memory_space<vmem>>, vector<16x16xf32>
    %c0_3 = arith.constant 0 : index
    %c0_4 = arith.constant 0 : index
    %2 = vector.load %arg2[%c0_3, %c0_4] : memref<16x8xf32, #tpu.memory_space<vmem>>, vector<16x8xf32>
    %c0_5 = arith.constant 0 : index
    %c0_6 = arith.constant 0 : index
    %3 = vector.load %arg3[%c0_5, %c0_6] : memref<96x128xf32, #tpu.memory_space<vmem>>, vector<8x32xf32>
    %c8 = arith.constant 8 : index
    %c0_7 = arith.constant 0 : index
    %4 = vector.load %arg3[%c8, %c0_7] : memref<96x128xf32, #tpu.memory_space<vmem>>, vector<1x32xf32>
    %c16 = arith.constant 16 : index
    %c0_8 = arith.constant 0 : index
    %5 = vector.load %arg3[%c16, %c0_8] : memref<96x128xf32, #tpu.memory_space<vmem>>, vector<32x32xf32>
    %c48 = arith.constant 48 : index
    %c0_9 = arith.constant 0 : index
    %6 = vector.load %arg3[%c48, %c0_9] : memref<96x128xf32, #tpu.memory_space<vmem>>, vector<1x32xf32>
    %c56 = arith.constant 56 : index
    %c0_10 = arith.constant 0 : index
    %7 = vector.load %arg3[%c56, %c0_10] : memref<96x128xf32, #tpu.memory_space<vmem>>, vector<32x8xf32>
    %c88 = arith.constant 88 : index
    %c0_11 = arith.constant 0 : index
    %8 = vector.load %arg3[%c88, %c0_11] : memref<96x128xf32, #tpu.memory_space<vmem>>, vector<1x8xf32>
    %cst = arith.constant dense<0.000000e+00> : vector<16x32xf32>
    %9 = tpu.matmul %2, %3, %cst {dimension_numbers = #tpu.dot_dimension_numbers<[1], [0], [0], [1], [0, 0, 1, 1], [], []>} : vector<16x8xf32>, vector<8x32xf32>, vector<16x32xf32> -> vector<16x32xf32>
    %10 = vector.broadcast %4 : vector<1x32xf32> to vector<16x32xf32>
    %11 = arith.addf %9, %10 : vector<16x32xf32>
    %cst_12 = arith.constant 0.000000e+00 : f32
    %12 = vector.broadcast %cst_12 : f32 to vector<16x32xf32>
    %13 = arith.maximumf %11, %12 : vector<16x32xf32>
    %cst_13 = arith.constant dense<0.000000e+00> : vector<16x32xf32>
    %14 = tpu.matmul %13, %5, %cst_13 {dimension_numbers = #tpu.dot_dimension_numbers<[1], [0], [0], [1], [0, 0, 1, 1], [], []>} : vector<16x32xf32>, vector<32x32xf32>, vector<16x32xf32> -> vector<16x32xf32>
    %15 = vector.broadcast %6 : vector<1x32xf32> to vector<16x32xf32>
    %16 = arith.addf %14, %15 : vector<16x32xf32>
    %17 = arith.mulf %0, %1 : vector<16x16xf32>
    %cst_14 = arith.constant dense<0.000000e+00> : vector<16x32xf32>
    %18 = tpu.matmul %17, %16, %cst_14 {dimension_numbers = #tpu.dot_dimension_numbers<[1], [0], [0], [1], [0, 0, 1, 1], [], []>} : vector<16x16xf32>, vector<16x32xf32>, vector<16x32xf32> -> vector<16x32xf32>
    %19 = arith.mulf %18, %18 : vector<16x32xf32>
    %cst_15 = arith.constant dense<0.000000e+00> : vector<16xf32>
    %20 = vector.multi_reduction <add>, %19, %cst_15 [1] : vector<16x32xf32> to vector<16xf32>
    %21 = vector.shape_cast %20 : vector<16xf32> to vector<16x1xf32>
    %22 = math.sqrt %21 : vector<16x1xf32>
    %cst_16 = arith.constant 9.99999996E-13 : f32
    %23 = vector.broadcast %cst_16 : f32 to vector<16x1xf32>
    %24 = arith.maximumf %21, %23 : vector<16x1xf32>
    %25 = math.rsqrt %24 : vector<16x1xf32>
    %cst_17 = arith.constant 0.000000e+00 : f32
    %cst_18 = arith.constant 1.500000e+01 : f32
    %26 = vector.broadcast %cst_17 : f32 to vector<16x1xf32>
    %27 = arith.maximumf %26, %22 : vector<16x1xf32>
    %28 = vector.broadcast %cst_18 : f32 to vector<16x1xf32>
    %29 = arith.minimumf %28, %27 : vector<16x1xf32>
    %30 = math.tanh %29 : vector<16x1xf32>
    %31 = vector.broadcast %30 : vector<16x1xf32> to vector<16x32xf32>
    %32 = arith.mulf %31, %18 : vector<16x32xf32>
    %33 = vector.broadcast %25 : vector<16x1xf32> to vector<16x32xf32>
    %34 = arith.mulf %32, %33 : vector<16x32xf32>
    %35 = arith.mulf %34, %34 : vector<16x32xf32>
    %cst_19 = arith.constant dense<0.000000e+00> : vector<16xf32>
    %36 = vector.multi_reduction <add>, %35, %cst_19 [1] : vector<16x32xf32> to vector<16xf32>
    %37 = vector.shape_cast %36 : vector<16xf32> to vector<16x1xf32>
    %38 = math.sqrt %37 : vector<16x1xf32>
    %cst_20 = arith.constant 9.99999997E-7 : f32
    %cst_21 = arith.constant 0.999998986 : f32
    %39 = vector.broadcast %cst_20 : f32 to vector<16x1xf32>
    %40 = arith.maximumf %39, %38 : vector<16x1xf32>
    %41 = vector.broadcast %cst_21 : f32 to vector<16x1xf32>
    %42 = arith.minimumf %41, %40 : vector<16x1xf32>
    %cst_22 = arith.constant 9.99999996E-13 : f32
    %43 = vector.broadcast %cst_22 : f32 to vector<16x1xf32>
    %44 = arith.maximumf %37, %43 : vector<16x1xf32>
    %45 = math.rsqrt %44 : vector<16x1xf32>
    %46 = math.log1p %42 : vector<16x1xf32>
    %cst_23 = arith.constant 0.000000e+00 : f32
    %47 = vector.broadcast %cst_23 : f32 to vector<16x1xf32>
    %48 = arith.subf %47, %42 : vector<16x1xf32>
    %49 = math.log1p %48 : vector<16x1xf32>
    %50 = arith.subf %46, %49 : vector<16x1xf32>
    %cst_24 = arith.constant 5.000000e-01 : f32
    %51 = vector.broadcast %cst_24 : f32 to vector<16x1xf32>
    %52 = arith.mulf %51, %50 : vector<16x1xf32>
    %53 = vector.broadcast %52 : vector<16x1xf32> to vector<16x32xf32>
    %54 = arith.mulf %53, %34 : vector<16x32xf32>
    %55 = vector.broadcast %45 : vector<16x1xf32> to vector<16x32xf32>
    %56 = arith.mulf %54, %55 : vector<16x32xf32>
    %cst_25 = arith.constant dense<0.000000e+00> : vector<16x8xf32>
    %57 = tpu.matmul %56, %7, %cst_25 {dimension_numbers = #tpu.dot_dimension_numbers<[1], [0], [0], [1], [0, 0, 1, 1], [], []>} : vector<16x32xf32>, vector<32x8xf32>, vector<16x8xf32> -> vector<16x8xf32>
    %58 = vector.broadcast %8 : vector<1x8xf32> to vector<16x8xf32>
    %59 = arith.addf %57, %58 : vector<16x8xf32>
    %cst_26 = arith.constant dense<0xFF800000> : vector<16xf32>
    %60 = vector.multi_reduction <maximumf>, %59, %cst_26 [1] : vector<16x8xf32> to vector<16xf32>
    %61 = vector.shape_cast %60 : vector<16xf32> to vector<16x1xf32>
    %62 = vector.broadcast %61 : vector<16x1xf32> to vector<16x8xf32>
    %63 = arith.subf %59, %62 : vector<16x8xf32>
    %64 = math.exp %63 : vector<16x8xf32>
    %cst_27 = arith.constant dense<0.000000e+00> : vector<16xf32>
    %65 = vector.multi_reduction <add>, %64, %cst_27 [1] : vector<16x8xf32> to vector<16xf32>
    %66 = vector.shape_cast %65 : vector<16xf32> to vector<16x1xf32>
    %67 = math.log %66 : vector<16x1xf32>
    %68 = vector.broadcast %67 : vector<16x1xf32> to vector<16x8xf32>
    %69 = arith.subf %63, %68 : vector<16x8xf32>
    %c0_28 = arith.constant 0 : index
    %c0_29 = arith.constant 0 : index
    %70 = vector.load %arg4[%c0_28, %c0_29] : memref<16x8xf32, #tpu.memory_space<vmem>>, vector<16x8xf32>
    tpu.vector_store %arg4[%c0_28, %c0_29], %69 {strides = array<i32>} : memref<16x8xf32, #tpu.memory_space<vmem>>, vector<16x8xf32>,
    return
  }
}

</mosaic_0001>

<llo_original>
// kernel: node_classification_extended.1
$region0: #{node_classification_extended.1}
  #allocation0 [shape = 'u32[]', space=smem, size = 0x4, offset = 0x4, fixed_abs, tag = 'smem constant byte address 0x4 - core index']
  #allocation1 [shape = 'u32[144,128]{1,0:T(1,128)}', space=vmem, size = 0x12000, scoped, tag = 'internal scratch']
  %s0 = inlined_call_operand.vmem [shape: f32[16,16], index: 0, kind: input, shape index: {}]
  %s1 = inlined_call_operand.vmem [shape: f32[16,16], index: 1, kind: input, shape index: {}]
  %s2 = inlined_call_operand.vmem [shape: f32[16,8], index: 2, kind: input, shape index: {}]
  %s3 = inlined_call_operand.hbm [shape: f32[96,128], index: 3, kind: input, shape index: {}]
  %s4 = inlined_call_operand.vmem [shape: f32[16,8], index: 4, kind: output, shape index: {}]
  %s5 = sld [smem:[#allocation0]]
  $region30: #{node_classification_extended.1} parent=0
    _
  %s7 = ssub.s32 1, %s5
  %s8 = scalar_select 0, %s7, %s5
  $region1: #{node_classification_extended.1} parent=0
    #allocation2 [shape = 'u8[49152]{0}', space=vmem, size = 0xc000, scoped, tag = 'input window, operand 3, single buffered']
    #allocation3 [shape = 's32[1]{0}', space=sflag, size = 0x4, scoped, tag = 'scoped memory for node_classification_extended.1']
    %9 = vsyncpa [#allocation3], 0
    // Predicated region
    $region2: #{node_classification_extended.1} parent=1 // pred_check
      _
    $region3: #{node_classification_extended.1} parent=1 // pred_check_branch
      %11 = sbr.rel (0) target = $region5
    $region4: #{node_classification_extended.1} parent=1 // pred_region
      _
    $region5: #{node_classification_extended.1} parent=1 // pred_fallthru
      _
    // Predicated region
    $region6: #{node_classification_extended.1} parent=1 // pred_check
      _
    $region7: #{node_classification_extended.1} parent=1 // pred_check_branch
      %13 = sbr.rel (0) target = $region9
    $region8: #{node_classification_extended.1} parent=1 // pred_region
      _
    $region9: #{node_classification_extended.1} parent=1 // pred_fallthru
      _
    // Predicated region
    $region10: #{node_classification_extended.1} parent=1 // pred_check
      _
    $region11: #{node_classification_extended.1} parent=1 // pred_check_branch
      %15 = sbr.rel (0) target = $region13
    $region12: #{node_classification_extended.1} parent=1 // pred_region
      _
    $region13: #{node_classification_extended.1} parent=1 // pred_fallthru
      _
    // Predicated region
    $region14: #{node_classification_extended.1} parent=1 // pred_check
      _
    $region15: #{node_classification_extended.1} parent=1 // pred_check_branch
      %17 = sbr.rel (0) target = $region17
    $region16: #{node_classification_extended.1} parent=1 // pred_region
      %s19 = ssub.s32 1536, 1536
      %20 = vsyncadd [#allocation3], %s19
      %s21 = sshll.u32 [#allocation2], 4
      %s22 = int_to_ptr.vmem [resolvable:$true] %s21
      %27 = dma.hbm_to_vmem [thread:$0]  %s3, 1536, %s22, [#allocation3], 128, 128, 8
    $region17: #{node_classification_extended.1} parent=1 // pred_fallthru
      _
    // Predicated region
    $region18: #{node_classification_extended.1} parent=1 // pred_check
      _
    $region19: #{node_classification_extended.1} parent=1 // pred_check_branch
      %29 = sbr.rel (0) target = $region21
    $region20: #{node_classification_extended.1} parent=1 // pred_region
      %30 = dma.done [#allocation3], 1536
    $region21: #{node_classification_extended.1} parent=1 // pred_fallthru
      _
    %v31 = vld [vmem:[%s0] sm:$0xff]
    %v32 = vld [vmem:[%s0 + $0x8] sm:$0xff]
    %v33 = vld [vmem:[%s1] sm:$0xff]
    %v34 = vld [vmem:[%s1 + $0x8] sm:$0xff]
    %v35 = vld [vmem:[%s2] sm:$0xff]
    %v36 = vld [vmem:[%s2 + $0x8] sm:$0xff]
    %v37 = vld [vmem:[#allocation2] sm:$0xff]
    %v38 = vld [vmem:[#allocation2 + $0x8] sm:$0x1]
    %v39 = vld [vmem:[#allocation2 + $0x10] sm:$0xff]
    %v40 = vld [vmem:[#allocation2 + $0x18] sm:$0xff]
    %v41 = vld [vmem:[#allocation2 + $0x20] sm:$0xff]
    %v42 = vld [vmem:[#allocation2 + $0x28] sm:$0xff]
    %v43 = vld [vmem:[#allocation2 + $0x30] sm:$0x1]
    %v44 = vld [vmem:[#allocation2 + $0x38] sm:$0xff]
    %v45 = vld [vmem:[#allocation2 + $0x40] sm:$0xff]
    %v46 = vld [vmem:[#allocation2 + $0x48] sm:$0xff]
    %v47 = vld [vmem:[#allocation2 + $0x50] sm:$0xff]
    %v48 = vld [vmem:[#allocation2 + $0x58] sm:$0x1]
    %v49 = vlaneseq
    %v50 = vshrl.u32 %v49, 7
    %v51 = vsub.s32 0, %v50
    %v52 = vrot.slane %v38, %v51
    %vm53 = vcmask 64512
    %v55 = vsel %vm53, %v35, 0
    %v58 = vsel %vm53, %v36, 0
    %60 = vmatprep.subr.mxu0 0.0
    %61 = vmatpush1.msra.mxu0 %v37
    %62 = vmatprep.subr.mxu0 0.0
    %63 = vmatpush1.msra.mxu0 0.0
    %64 = vmatprep.subr.mxu0 0.0
    %65 = vmatpush1.msra.mxu0 0.0
    %66 = vmatprep.subr.mxu0 0.0
    %67 = vmatpush1.msra.mxu0 0.0
    %68 = vmatprep.subr.mxu0 0.0
    %69 = vmatpush1.msra.mxu0 0.0
    %70 = vmatprep.subr.mxu0 0.0
    %71 = vmatpush1.msra.mxu0 0.0
    %72 = vmatprep.subr.mxu0 0.0
    %73 = vmatpush1.msra.mxu0 0.0
    %74 = vmatprep.subr.mxu0 0.0
    %75 = vmatpush1.msra.mxu0 0.0
    %76 = vmatprep.subr.mxu0 0.0
    %77 = vmatpush1.msra.mxu0 0.0
    %78 = vmatprep.subr.mxu0 0.0
    %79 = vmatpush1.msra.mxu0 0.0
    %80 = vmatprep.subr.mxu0 0.0
    %81 = vmatpush1.msra.mxu0 0.0
    %82 = vmatprep.subr.mxu0 0.0
    %83 = vmatpush1.msra.mxu0 0.0
    %84 = vmatprep.subr.mxu0 0.0
    %85 = vmatpush1.msra.mxu0 0.0
    %86 = vmatprep.subr.mxu0 0.0
    %87 = vmatpush1.msra.mxu0 0.0
    %88 = vmatprep.subr.mxu0 0.0
    %89 = vmatpush1.msra.mxu0 0.0
    %90 = vmatprep.subr.mxu0 0.0
    %91 = vmatpush1.msra.mxu0 0.0
    %92 = vmatprep.subr.mxu0 0.0
    %93 = vmatpush1.msra.mxu0 0.0
    %94 = vmatprep.subr.mxu0 0.0
    %95 = vmatpush1.msra.mxu0 0.0
    %96 = vmatprep.subr.mxu0 0.0
    %97 = vmatpush1.msra.mxu0 0.0
    %98 = vmatprep.subr.mxu0 0.0
    %99 = vmatpush1.msra.mxu0 0.0
    %100 = vmatprep.subr.mxu0 0.0
    %101 = vmatpush1.msra.mxu0 0.0
    %102 = vmatprep.subr.mxu0 0.0
    %103 = vmatpush1.msra.mxu0 0.0
    %104 = vmatprep.subr.mxu0 0.0
    %105 = vmatpush1.msra.mxu0 0.0
    %106 = vmatprep.subr.mxu0 0.0
    %107 = vmatpush1.msra.mxu0 0.0
    %108 = vmatprep.subr.mxu0 0.0
    %109 = vmatpush1.msra.mxu0 0.0
    %110 = vmatprep.subr.mxu0 0.0
    %111 = vmatpush1.msra.mxu0 0.0
    %112 = vmatprep.subr.mxu0 0.0
    %113 = vmatpush1.msra.mxu0 0.0
    %114 = vmatprep.subr.mxu0 0.0
    %115 = vmatpush1.msra.mxu0 0.0
    %116 = vmatprep.subr.mxu0 0.0
    %117 = vmatpush1.msra.mxu0 0.0
    %118 = vmatprep.subr.mxu0 0.0
    %119 = vmatpush1.msra.mxu0 0.0
    %120 = vmatprep.subr.mxu0 0.0
    %121 = vmatpush1.msra.mxu0 0.0
    %122 = vmatprep.subr.mxu0 0.0
    %123 = vmatpush1.msra.mxu0 0.0
    %124 = vmatprep.mubr.f32.mxu0 0.0
    %125 = vmatmul.mubr.f32.gmra.mrb[0].mxu0 %v55
    %v126 = vpop.f32.mrb[0].mxu0
    %v127 = vadd.f32 %v52, %v126
    %v128 = vpop.f32.mrb[0].mxu0
    %129 = vmatprep.mubr.f32.mxu0 0.0
    %130 = vmatmul.mubr.f32.gmra.mrb[0].mxu0 %v58
    %v131 = vpop.f32.mrb[0].mxu0
    %v132 = vadd.f32 %v52, %v131
    %v133 = vpop.f32.mrb[0].mxu0
    %134 = vdwg.mxu0
    %v135 = vmax.f32 %v127, 0.0
    %v136 = vmax.f32 %v132, 0.0
    %v137 = vlaneseq
    %v138 = vshrl.u32 %v137, 7
    %v139 = vsub.s32 0, %v138
    %v140 = vrot.slane %v43, %v139
    %vm141 = vcmask 261120
    %v143 = vsel %vm141, %v135, 0
    %v146 = vsel %vm141, %v136, 0
    %148 = vmatprep.subr.mxu0 0.0
    %149 = vmatpush1.msra.mxu0 %v39
    %150 = vmatprep.subr.mxu0 0.0
    %151 = vmatpush1.msra.mxu0 %v40
    %152 = vmatprep.subr.mxu0 0.0
    %153 = vmatpush1.msra.mxu0 %v41
    %154 = vmatprep.subr.mxu0 0.0
    %155 = vmatpush1.msra.mxu0 %v42
    %156 = vmatprep.subr.mxu0 0.0
    %157 = vmatpush1.msra.mxu0 0.0
    %158 = vmatprep.subr.mxu0 0.0
    %159 = vmatpush1.msra.mxu0 0.0
    %160 = vmatprep.subr.mxu0 0.0
    %161 = vmatpush1.msra.mxu0 0.0
    %162 = vmatprep.subr.mxu0 0.0
    %163 = vmatpush1.msra.mxu0 0.0
    %164 = vmatprep.subr.mxu0 0.0
    %165 = vmatpush1.msra.mxu0 0.0
    %166 = vmatprep.subr.mxu0 0.0
    %167 = vmatpush1.msra.mxu0 0.0
    %168 = vmatprep.subr.mxu0 0.0
    %169 = vmatpush1.msra.mxu0 0.0
    %170 = vmatprep.subr.mxu0 0.0
    %171 = vmatpush1.msra.mxu0 0.0
    %172 = vmatprep.subr.mxu0 0.0
    %173 = vmatpush1.msra.mxu0 0.0
    %174 = vmatprep.subr.mxu0 0.0
    %175 = vmatpush1.msra.mxu0 0.0
    %176 = vmatprep.subr.mxu0 0.0
    %177 = vmatpush1.msra.mxu0 0.0
    %178 = vmatprep.subr.mxu0 0.0
    %179 = vmatpush1.msra.mxu0 0.0
    %180 = vmatprep.subr.mxu0 0.0
    %181 = vmatpush1.msra.mxu0 0.0
    %182 = vmatprep.subr.mxu0 0.0
    %183 = vmatpush1.msra.mxu0 0.0
    %184 = vmatprep.subr.mxu0 0.0
    %185 = vmatpush1.msra.mxu0 0.0
    %186 = vmatprep.subr.mxu0 0.0
    %187 = vmatpush1.msra.mxu0 0.0
    %188 = vmatprep.subr.mxu0 0.0
    %189 = vmatpush1.msra.mxu0 0.0
    %190 = vmatprep.subr.mxu0 0.0
    %191 = vmatpush1.msra.mxu0 0.0
    %192 = vmatprep.subr.mxu0 0.0
    %193 = vmatpush1.msra.mxu0 0.0
    %194 = vmatprep.subr.mxu0 0.0
    %195 = vmatpush1.msra.mxu0 0.0
    %196 = vmatprep.subr.mxu0 0.0
    %197 = vmatpush1.msra.mxu0 0.0
    %198 = vmatprep.subr.mxu0 0.0
    %199 = vmatpush1.msra.mxu0 0.0
    %200 = vmatprep.subr.mxu0 0.0
    %201 = vmatpush1.msra.mxu0 0.0
    %202 = vmatprep.subr.mxu0 0.0
    %203 = vmatpush1.msra.mxu0 0.0
    %204 = vmatprep.subr.mxu0 0.0
    %205 = vmatpush1.msra.mxu0 0.0
    %206 = vmatprep.subr.mxu0 0.0
    %207 = vmatpush1.msra.mxu0 0.0
    %208 = vmatprep.subr.mxu0 0.0
    %209 = vmatpush1.msra.mxu0 0.0
    %210 = vmatprep.subr.mxu0 0.0
    %211 = vmatpush1.msra.mxu0 0.0
    %212 = vmatprep.mubr.f32.mxu0 0.0
    %213 = vmatmul.mubr.f32.gmra.mrb[0].mxu0 %v143
    %v214 = vpop.f32.mrb[0].mxu0
    %v215 = vadd.f32 %v140, %v214
    %v216 = vpop.f32.mrb[0].mxu0
    %217 = vmatprep.mubr.f32.mxu0 0.0
    %218 = vmatmul.mubr.f32.gmra.mrb[0].mxu0 %v146
    %v219 = vpop.f32.mrb[0].mxu0
    %v220 = vadd.f32 %v140, %v219
    %v221 = vpop.f32.mrb[0].mxu0
    %222 = vdwg.mxu0
    %v223 = vmul.f32 %v31, %v33
    %v224 = vmul.f32 %v32, %v34
    %vm225 = vcmask 130048
    %v227 = vsel %vm225, %v223, 0
    %v230 = vsel %vm225, %v224, 0
    %232 = vmatprep.subr.mxu0 0.0
    %233 = vmatpush1.msra.mxu0 %v215
    %234 = vmatprep.subr.mxu0 0.0
    %235 = vmatpush1.msra.mxu0 %v220
    %236 = vmatprep.subr.mxu0 0.0
    %237 = vmatpush1.msra.mxu0 0.0
    %238 = vmatprep.subr.mxu0 0.0
    %239 = vmatpush1.msra.mxu0 0.0
    %240 = vmatprep.subr.mxu0 0.0
    %241 = vmatpush1.msra.mxu0 0.0
    %242 = vmatprep.subr.mxu0 0.0
    %243 = vmatpush1.msra.mxu0 0.0
    %244 = vmatprep.subr.mxu0 0.0
    %245 = vmatpush1.msra.mxu0 0.0
    %246 = vmatprep.subr.mxu0 0.0
    %247 = vmatpush1.msra.mxu0 0.0
    %248 = vmatprep.subr.mxu0 0.0
    %249 = vmatpush1.msra.mxu0 0.0
    %250 = vmatprep.subr.mxu0 0.0
    %251 = vmatpush1.msra.mxu0 0.0
    %252 = vmatprep.subr.mxu0 0.0
    %253 = vmatpush1.msra.mxu0 0.0
    %254 = vmatprep.subr.mxu0 0.0
    %255 = vmatpush1.msra.mxu0 0.0
    %256 = vmatprep.subr.mxu0 0.0
    %257 = vmatpush1.msra.mxu0 0.0
    %258 = vmatprep.subr.mxu0 0.0
    %259 = vmatpush1.msra.mxu0 0.0
    %260 = vmatprep.subr.mxu0 0.0
    %261 = vmatpush1.msra.mxu0 0.0
    %262 = vmatprep.subr.mxu0 0.0
    %263 = vmatpush1.msra.mxu0 0.0
    %264 = vmatprep.subr.mxu0 0.0
    %265 = vmatpush1.msra.mxu0 0.0
    %266 = vmatprep.subr.mxu0 0.0
    %267 = vmatpush1.msra.mxu0 0.0
    %268 = vmatprep.subr.mxu0 0.0
    %269 = vmatpush1.msra.mxu0 0.0
    %270 = vmatprep.subr.mxu0 0.0
    %271 = vmatpush1.msra.mxu0 0.0
    %272 = vmatprep.subr.mxu0 0.0
    %273 = vmatpush1.msra.mxu0 0.0
    %274 = vmatprep.subr.mxu0 0.0
    %275 = vmatpush1.msra.mxu0 0.0
    %276 = vmatprep.subr.mxu0 0.0
    %277 = vmatpush1.msra.mxu0 0.0
    %278 = vmatprep.subr.mxu0 0.0
    %279 = vmatpush1.msra.mxu0 0.0
    %280 = vmatprep.subr.mxu0 0.0
    %281 = vmatpush1.msra.mxu0 0.0
    %282 = vmatprep.subr.mxu0 0.0
    %283 = vmatpush1.msra.mxu0 0.0
    %284 = vmatprep.subr.mxu0 0.0
    %285 = vmatpush1.msra.mxu0 0.0
    %286 = vmatprep.subr.mxu0 0.0
    %287 = vmatpush1.msra.mxu0 0.0
    %288 = vmatprep.subr.mxu0 0.0
    %289 = vmatpush1.msra.mxu0 0.0
    %290 = vmatprep.subr.mxu0 0.0
    %291 = vmatpush1.msra.mxu0 0.0
    %292 = vmatprep.subr.mxu0 0.0
    %293 = vmatpush1.msra.mxu0 0.0
    %294 = vmatprep.subr.mxu0 0.0
    %295 = vmatpush1.msra.mxu0 0.0
    %296 = vmatprep.mubr.f32.mxu0 0.0
    %297 = vmatmul.mubr.f32.gmra.mrb[0].mxu0 %v227
    %v298 = vpop.f32.mrb[0].mxu0
    %v299 = vadd.f32 0.0, %v298
    %v300 = vpop.f32.mrb[0].mxu0
    %301 = vmatprep.mubr.f32.mxu0 0.0
    %302 = vmatmul.mubr.f32.gmra.mrb[0].mxu0 %v230
    %v303 = vpop.f32.mrb[0].mxu0
    %v304 = vadd.f32 0.0, %v303
    %v305 = vpop.f32.mrb[0].mxu0
    %306 = vdwg.mxu0
    %v307 = vmul.f32 %v299, %v299
    %v308 = vmul.f32 %v304, %v304
    %v309 = vsel %vm141, %v307, 0.0
    %310 = vadd.xlane.f32.xlu0 %v309
    %v311 = vpop.xlane.xlu0 %310
    %v312 = vsel %vm141, %v308, 0.0
    %313 = vadd.xlane.f32.xlu0 %v312
    %v314 = vpop.xlane.xlu0 %313
    %v315 = vrsqrt.pop %v311
    %v316 = vmul.f32 %v311, %v315
    %vm317 = vcmp.eq.f32.partialorder %v311, inf
    %v318 = vsel %vm317, %v311, %v316
    %vm319 = vcmp.eq.f32.partialorder %v311, 0.0
    %v320 = vand.u32 %v311, 2147483648
    %v321 = vsel %vm319, %v320, %v318
    %v322 = vrsqrt.pop %v314
    %v323 = vmul.f32 %v314, %v322
    %vm324 = vcmp.eq.f32.partialorder %v314, inf
    %v325 = vsel %vm324, %v314, %v323
    %vm326 = vcmp.eq.f32.partialorder %v314, 0.0
    %v327 = vand.u32 %v314, 2147483648
    %v328 = vsel %vm326, %v327, %v325
    %v329 = vmax.f32 %v311, 1e-12
    %v330 = vmax.f32 %v314, 1e-12
    %v331 = vrsqrt.pop %v329
    %v332 = vrsqrt.pop %v330
    %v333 = vmax.f32 %v321, 0.0
    %v334 = vmax.f32 %v328, 0.0
    %v335 = vmin.f32 %v333, 15.0
    %v336 = vmin.f32 %v334, 15.0
    %v337 = vtanh.pop %v335
    %v338 = vtanh.pop %v336
    %v339 = vmul.f32 %v337, %v299
    %v340 = vmul.f32 %v338, %v304
    %v341 = vmul.f32 %v339, %v331
    %v342 = vmul.f32 %v340, %v332
    %v343 = vmul.f32 %v341, %v341
    %v344 = vmul.f32 %v342, %v342
    %v345 = vsel %vm141, %v343, 0.0
    %346 = vadd.xlane.f32.xlu0 %v345
    %v347 = vpop.xlane.xlu0 %346
    %v348 = vsel %vm141, %v344, 0.0
    %349 = vadd.xlane.f32.xlu0 %v348
    %v350 = vpop.xlane.xlu0 %349
    %v351 = vrsqrt.pop %v347
    %v352 = vmul.f32 %v347, %v351
    %vm353 = vcmp.eq.f32.partialorder %v347, inf
    %v354 = vsel %vm353, %v347, %v352
    %vm355 = vcmp.eq.f32.partialorder %v347, 0.0
    %v356 = vand.u32 %v347, 2147483648
    %v357 = vsel %vm355, %v356, %v354
    %v358 = vrsqrt.pop %v350
    %v359 = vmul.f32 %v350, %v358
    %vm360 = vcmp.eq.f32.partialorder %v350, inf
    %v361 = vsel %vm360, %v350, %v359
    %vm362 = vcmp.eq.f32.partialorder %v350, 0.0
    %v363 = vand.u32 %v350, 2147483648
    %v364 = vsel %vm362, %v363, %v361
    %v365 = vmax.f32 %v357, 1e-06
    %v366 = vmax.f32 %v364, 1e-06
    %v367 = vmin.f32 %v365, 0.999999
    %v368 = vmin.f32 %v366, 0.999999
    %v369 = vmax.f32 %v347, 1e-12
    %v370 = vmax.f32 %v350, 1e-12
    %v371 = vrsqrt.pop %v369
    %v372 = vrsqrt.pop %v370
    %v373 = vadd.f32 %v367, 1.0
    %v374 = vlog2.pop %v373
    %v375 = vmul.f32 %v374, 0.6931472
    %v376 = vmul.f32 -0.5, %v367
    %v377 = vadd.f32 %v376, 1.0
    %v378 = vmul.f32 %v377, %v367
    %v379 = vand.u32 2147483647, %v367
    %vm380 = vcmp.lt.f32.partialorder %v379, 0.0004427343
    %v381 = vsel %vm380, %v378, %v375
    %v382 = vadd.f32 %v368, 1.0
    %v383 = vlog2.pop %v382
    %v384 = vmul.f32 %v383, 0.6931472
    %v385 = vmul.f32 -0.5, %v368
    %v386 = vadd.f32 %v385, 1.0
    %v387 = vmul.f32 %v386, %v368
    %v388 = vand.u32 2147483647, %v368
    %vm389 = vcmp.lt.f32.partialorder %v388, 0.0004427343
    %v390 = vsel %vm389, %v387, %v384
    %v391 = vsub.f32 0.0, %v367
    %v392 = vsub.f32 0.0, %v368
    %v393 = vadd.f32 %v391, 1.0
    %v394 = vlog2.pop %v393
    %v395 = vmul.f32 %v394, 0.6931472
    %v396 = vmul.f32 -0.5, %v391
    %v397 = vadd.f32 %v396, 1.0
    %v398 = vmul.f32 %v397, %v391
    %v399 = vand.u32 2147483647, %v391
    %vm400 = vcmp.lt.f32.partialorder %v399, 0.0004427343
    %v401 = vsel %vm400, %v398, %v395
    %v402 = vadd.f32 %v392, 1.0
    %v403 = vlog2.pop %v402
    %v404 = vmul.f32 %v403, 0.6931472
    %v405 = vmul.f32 -0.5, %v392
    %v406 = vadd.f32 %v405, 1.0
    %v407 = vmul.f32 %v406, %v392
    %v408 = vand.u32 2147483647, %v392
    %vm409 = vcmp.lt.f32.partialorder %v408, 0.0004427343
    %v410 = vsel %vm409, %v407, %v404
    %v411 = vsub.f32 %v381, %v401
    %v412 = vsub.f32 %v390, %v410
    %v413 = vmul.f32 %v411, 0.5
    %v414 = vmul.f32 %v412, 0.5
    %v415 = vmul.f32 %v413, %v341
    %v416 = vmul.f32 %v414, %v342
    %v417 = vmul.f32 %v415, %v371
    %v418 = vmul.f32 %v416, %v372
    %v419 = vlaneseq
    %v420 = vshrl.u32 %v419, 7
    %v421 = vsub.s32 0, %v420
    %v422 = vrot.slane %v48, %v421
    %v424 = vsel %vm141, %v417, 0
    %v427 = vsel %vm141, %v418, 0
    %429 = vmatprep.subr.mxu0 0.0
    %430 = vmatpush1.msra.mxu0 %v44
    %431 = vmatprep.subr.mxu0 0.0
    %432 = vmatpush1.msra.mxu0 %v45
    %433 = vmatprep.subr.mxu0 0.0
    %434 = vmatpush1.msra.mxu0 %v46
    %435 = vmatprep.subr.mxu0 0.0
    %436 = vmatpush1.msra.mxu0 %v47
    %437 = vmatprep.subr.mxu0 0.0
    %438 = vmatpush1.msra.mxu0 0.0
    %439 = vmatprep.subr.mxu0 0.0
    %440 = vmatpush1.msra.mxu0 0.0
    %441 = vmatprep.subr.mxu0 0.0
    %442 = vmatpush1.msra.mxu0 0.0
    %443 = vmatprep.subr.mxu0 0.0
    %444 = vmatpush1.msra.mxu0 0.0
    %445 = vmatprep.subr.mxu0 0.0
    %446 = vmatpush1.msra.mxu0 0.0
    %447 = vmatprep.subr.mxu0 0.0
    %448 = vmatpush1.msra.mxu0 0.0
    %449 = vmatprep.subr.mxu0 0.0
    %450 = vmatpush1.msra.mxu0 0.0
    %451 = vmatprep.subr.mxu0 0.0
    %452 = vmatpush1.msra.mxu0 0.0
    %453 = vmatprep.subr.mxu0 0.0
    %454 = vmatpush1.msra.mxu0 0.0
    %455 = vmatprep.subr.mxu0 0.0
    %456 = vmatpush1.msra.mxu0 0.0
    %457 = vmatprep.subr.mxu0 0.0
    %458 = vmatpush1.msra.mxu0 0.0
    %459 = vmatprep.subr.mxu0 0.0
    %460 = vmatpush1.msra.mxu0 0.0
    %461 = vmatprep.subr.mxu0 0.0
    %462 = vmatpush1.msra.mxu0 0.0
    %463 = vmatprep.subr.mxu0 0.0
    %464 = vmatpush1.msra.mxu0 0.0
    %465 = vmatprep.subr.mxu0 0.0
    %466 = vmatpush1.msra.mxu0 0.0
    %467 = vmatprep.subr.mxu0 0.0
    %468 = vmatpush1.msra.mxu0 0.0
    %469 = vmatprep.subr.mxu0 0.0
    %470 = vmatpush1.msra.mxu0 0.0
    %471 = vmatprep.subr.mxu0 0.0
    %472 = vmatpush1.msra.mxu0 0.0
    %473 = vmatprep.subr.mxu0 0.0
    %474 = vmatpush1.msra.mxu0 0.0
    %475 = vmatprep.subr.mxu0 0.0
    %476 = vmatpush1.msra.mxu0 0.0
    %477 = vmatprep.subr.mxu0 0.0
    %478 = vmatpush1.msra.mxu0 0.0
    %479 = vmatprep.subr.mxu0 0.0
    %480 = vmatpush1.msra.mxu0 0.0
    %481 = vmatprep.subr.mxu0 0.0
    %482 = vmatpush1.msra.mxu0 0.0
    %483 = vmatprep.subr.mxu0 0.0
    %484 = vmatpush1.msra.mxu0 0.0
    %485 = vmatprep.subr.mxu0 0.0
    %486 = vmatpush1.msra.mxu0 0.0
    %487 = vmatprep.subr.mxu0 0.0
    %488 = vmatpush1.msra.mxu0 0.0
    %489 = vmatprep.subr.mxu0 0.0
    %490 = vmatpush1.msra.mxu0 0.0
    %491 = vmatprep.subr.mxu0 0.0
    %492 = vmatpush1.msra.mxu0 0.0
    %493 = vmatprep.mubr.f32.mxu0 0.0
    %494 = vmatmul.mubr.f32.gmra.mrb[0].mxu0 %v424
    %v495 = vpop.f32.mrb[0].mxu0
    %v496 = vadd.f32 %v422, %v495
    %v497 = vpop.f32.mrb[0].mxu0
    %498 = vmatprep.mubr.f32.mxu0 0.0
    %499 = vmatmul.mubr.f32.gmra.mrb[0].mxu0 %v427
    %v500 = vpop.f32.mrb[0].mxu0
    %v501 = vadd.f32 %v422, %v500
    %v502 = vpop.f32.mrb[0].mxu0
    %503 = vdwg.mxu0
    %v504 = vsel %vm53, %v496, -inf
    %505 = vmax.xlane.f32.xlu0 %v504
    %v506 = vpop.xlane.xlu0 %505
    %v507 = vsel %vm53, %v501, -inf
    %508 = vmax.xlane.f32.xlu0 %v507
    %v509 = vpop.xlane.xlu0 %508
    %v510 = vsub.f32 %v496, %v506
    %v511 = vsub.f32 %v501, %v509
    %v512 = vmul.f32 %v510, 1.442695
    %v513 = vpow.pop %v512
    %v514 = vmul.f32 %v511, 1.442695
    %v515 = vpow.pop %v514
    %v516 = vsel %vm53, %v513, 0.0
    %517 = vadd.xlane.f32.xlu0 %v516
    %v518 = vpop.xlane.xlu0 %517
    %v519 = vsel %vm53, %v515, 0.0
    %520 = vadd.xlane.f32.xlu0 %v519
    %v521 = vpop.xlane.xlu0 %520
    %v522 = vlog2.pop %v518
    %v523 = vmul.f32 %v522, 0.6931472
    %v524 = vlog2.pop %v521
    %v525 = vmul.f32 %v524, 0.6931472
    %v526 = vsub.f32 %v510, %v523
    %v527 = vsub.f32 %v511, %v525
    %528 = vst.msk [vmem:[%s4] sm:$0xff] %vm53, %v526
    %529 = vst.msk [vmem:[%s4 + $0x8] sm:$0xff] %vm53, %v527
    // Predicated region
    $region22: #{node_classification_extended.1} parent=1 // pred_check
      _
    $region23: #{node_classification_extended.1} parent=1 // pred_check_branch
      %531 = sbr.rel (0) target = $region25
    $region24: #{node_classification_extended.1} parent=1 // pred_region
      _
    $region25: #{node_classification_extended.1} parent=1 // pred_fallthru
      _
    // Predicated region
    $region26: #{node_classification_extended.1} parent=1 // pred_check
      _
    $region27: #{node_classification_extended.1} parent=1 // pred_check_branch
      %533 = sbr.rel (0) target = $region29
    $region28: #{node_classification_extended.1} parent=1 // pred_region
      _
    $region29: #{node_classification_extended.1} parent=1 // pred_fallthru
      _
    %534 = vsyncpa [#allocation3], 1

</llo_original>
